<compile_context>
chip_gen: v7x
topology: tpu7x:2x2x1
jax: 0.10.0
libtpu: 0.0.40
codegen_flags: <defaults>
</compile_context>

<pallas_src>
import functools

import jax
import jax.numpy as jnp
from jax.experimental import pallas as pl
from jax.experimental.pallas import tpu as pltpu

HEAD_PAD = 128            # lane-dense output width of the fused head
VALUE_COL = HEAD_PAD - 1  # column carrying the value-stream output


def ddqn_forward_kernel(
    x_ref,                  # (TB, state_size)         float32
    w1_ref, b1_ref,         # (state_size, 512) bf16 / (1, 512) f32
    w2_ref, b2_ref,         # (512, 256)        bf16 / (1, 256) f32
    wh1_ref, bh1_ref,       # fused head layer 1: (256, 256) bf16 / (1, 256) f32
    wh2_ref, bh2_ref,       # fused head layer 2: (256, 128) bf16 / (1, 128) f32
    q_ref,                  # (TB, 128) float32 output
    *,
    action_size: int,
):
    f32 = jnp.float32
    bf16 = jnp.bfloat16

    x = x_ref[...].astype(bf16)

    # shared_layers: Linear -> ReLU -> (Dropout id) -> Linear -> ReLU -> (Dropout id)
    h = jnp.dot(x, w1_ref[...], preferred_element_type=f32) + b1_ref[...]
    h = jnp.maximum(h, 0.0)
    h = jnp.dot(h.astype(bf16), w2_ref[...], preferred_element_type=f32) + b2_ref[...]
    h = jnp.maximum(h, 0.0)

    # fused head layer 1: [value_hidden | advantage_hidden] -> (TB, 256)
    g = jnp.dot(h.astype(bf16), wh1_ref[...], preferred_element_type=f32) + bh1_ref[...]
    g = jnp.maximum(g, 0.0)

    # fused block-diagonal head layer 2 -> (TB, 128)
    #   cols [0, action_size): advantage, col VALUE_COL: value, rest: 0
    z = jnp.dot(g.astype(bf16), wh2_ref[...], preferred_element_type=f32) + bh2_ref[...]

    col = jax.lax.broadcasted_iota(jnp.int32, z.shape, 1)
    adv_mask = col < action_size
    a = jnp.where(adv_mask, z, 0.0)
    v = jnp.sum(jnp.where(col == VALUE_COL, z, 0.0), axis=1, keepdims=True)
    a_mean = jnp.sum(a, axis=1, keepdims=True) * (1.0 / action_size)

    # dueling combine: q = value + (advantage - advantage.mean(dim=1, keepdim=True))
    q_ref[...] = jnp.where(adv_mask, v + (a - a_mean), 0.0)


def _round_up(n, m):
    return ((n + m - 1) // m) * m


def prepare_kernel_params(p, action_size):
    """Cast weights to bf16 and fuse the value/advantage head layers for the kernel."""
    assert action_size <= HEAD_PAD - 1, "action_size must leave room for the value column"
    bf16 = jnp.bfloat16
    f32 = jnp.float32

    # head layer 1: concat along the output axis -> (256, 256)
    wh1 = jnp.concatenate([p["wv1"], p["wa1"]], axis=1).astype(bf16)
    bh1 = jnp.concatenate([p["bv1"], p["ba1"]], axis=1).astype(f32)

    # head layer 2: block-diagonal, padded to 128 output lanes
    hid = p["wv1"].shape[1]  # 128
    wh2 = jnp.zeros((2 * hid, HEAD_PAD), f32)
    wh2 = wh2.at[:hid, VALUE_COL:VALUE_COL + 1].set(p["wv2"])   # value  -> col 127
    wh2 = wh2.at[hid:, :action_size].set(p["wa2"])              # advtg  -> cols [0, A)
    wh2 = wh2.astype(bf16)

    bh2 = jnp.zeros((1, HEAD_PAD), f32)
    bh2 = bh2.at[:, VALUE_COL:VALUE_COL + 1].set(p["bv2"])
    bh2 = bh2.at[:, :action_size].set(p["ba2"])

    return dict(
        w1=p["w1"].astype(bf16), b1=p["b1"].astype(f32),
        w2=p["w2"].astype(bf16), b2=p["b2"].astype(f32),
        wh1=wh1, bh1=bh1, wh2=wh2, bh2=bh2,
    )


def ddqn_forward(state, kernel_params, action_size):
    """Dueling-DQN forward pass: batch-tiled grid, weights VMEM-resident across steps."""
    B, state_size = state.shape

    # Batch tile: fill the MXU M dimension for large batches, else one sublane-aligned tile.
    TB = 256 if B > 256 else _round_up(max(B, 1), 8)
    B_pad = _round_up(B, TB)
    if B_pad != B:
        state = jnp.pad(state, ((0, B_pad - B), (0, 0)))

    kp = kernel_params
    weights = (kp["w1"], kp["b1"], kp["w2"], kp["b2"],
               kp["wh1"], kp["bh1"], kp["wh2"], kp["bh2"])

    in_specs = [pl.BlockSpec((TB, state_size), lambda i: (i, 0))]
    in_specs += [pl.BlockSpec(w.shape, lambda i: (0, 0)) for w in weights]
    out_spec = pl.BlockSpec((TB, HEAD_PAD), lambda i: (i, 0))

    flops = 2 * B_pad * (state_size * 512 + 512 * 256 + 256 * 256 + 256 * HEAD_PAD)
    bytes_accessed = (
        sum(int(w.size) * w.dtype.itemsize for w in weights)
        + B_pad * state_size * 4
        + B_pad * HEAD_PAD * 4
    )

    q_pad = pl.pallas_call(
        functools.partial(ddqn_forward_kernel, action_size=action_size),
        out_shape=jax.ShapeDtypeStruct((B_pad, HEAD_PAD), jnp.float32),
        grid=(B_pad // TB,),
        in_specs=in_specs,
        out_specs=out_spec,
        compiler_params=pltpu.CompilerParams(
            dimension_semantics=("parallel",),
        ),
        cost_estimate=pl.CostEstimate(
            flops=flops, transcendentals=0, bytes_accessed=bytes_accessed),
    )(state, *weights)

    return q_pad[:B, :action_size]


def init_params(key, state_size, action_size):
    """Deterministic init matching PyTorch nn.Linear shapes, stored as (in, out)."""
    def linear(key, fan_in, fan_out):
        kw, kb = jax.random.split(key)
        bound = 1.0 / jnp.sqrt(fan_in)
        w = jax.random.uniform(kw, (fan_in, fan_out), jnp.float32, -bound, bound)
        b = jax.random.uniform(kb, (1, fan_out), jnp.float32, -bound, bound)
        return w, b

    keys = jax.random.split(key, 6)
    w1, b1 = linear(keys[0], state_size, 512)
    w2, b2 = linear(keys[1], 512, 256)
    wv1, bv1 = linear(keys[2], 256, 128)
    wv2, bv2 = linear(keys[3], 128, 1)
    wa1, ba1 = linear(keys[4], 256, 128)
    wa2, ba2 = linear(keys[5], 128, action_size)
    return dict(
        w1=w1, b1=b1, w2=w2, b2=b2,
        wv1=wv1, bv1=bv1, wv2=wv2, bv2=bv2,
        wa1=wa1, ba1=ba1, wa2=wa2, ba2=ba2,
    )


def ddqn_forward_ref(state, p):
    """Pure-JAX reference using the same bf16 weight rounding as the kernel."""
    bf16 = jnp.bfloat16
    f32 = jnp.float32

    def mm(x, w):
        return jax.lax.dot(x.astype(bf16), w.astype(bf16), preferred_element_type=f32)

    h = jnp.maximum(mm(state, p["w1"]) + p["b1"], 0.0)
    h = jnp.maximum(mm(h, p["w2"]) + p["b2"], 0.0)
    v = mm(jnp.maximum(mm(h, p["wv1"]) + p["bv1"], 0.0), p["wv2"]) + p["bv2"]
    a = mm(jnp.maximum(mm(h, p["wa1"]) + p["ba1"], 0.0), p["wa2"]) + p["ba2"]
    return v + (a - jnp.mean(a, axis=1, keepdims=True))


if __name__ == "__main__":
    state_size = 32
    action_size = 8
    batch = 2

    key = jax.random.PRNGKey(0)
    k_params, k_state = jax.random.split(key)
    params = init_params(k_params, state_size, action_size)
    kernel_params = prepare_kernel_params(params, action_size)
    state = jax.random.normal(k_state, (batch, state_size), dtype=jnp.float32)

    q = ddqn_forward(state, kernel_params, action_size)
    q = jax.block_until_ready(q)

    q_ref = ddqn_forward_ref(state, params)
    assert q.shape == (batch, action_size)
    assert jnp.allclose(q, q_ref, atol=2e-3, rtol=2e-3), "mismatch vs reference"

    print("KERNEL_OK")
</pallas_src>

<mosaic_0001>
module attributes {stable_mosaic.version = 11 : i64} {
  func.func @ddqn_forward_kernel(%arg0: i32, %arg1: memref<8x32xf32, #tpu.memory_space<vmem>>, %arg2: memref<32x512xbf16, #tpu.memory_space<vmem>>, %arg3: memref<1x512xf32, #tpu.memory_space<vmem>>, %arg4: memref<512x256xbf16, #tpu.memory_space<vmem>>, %arg5: memref<1x256xf32, #tpu.memory_space<vmem>>, %arg6: memref<256x256xbf16, #tpu.memory_space<vmem>>, %arg7: memref<1x256xf32, #tpu.memory_space<vmem>>, %arg8: memref<256x128xbf16, #tpu.memory_space<vmem>>, %arg9: memref<1x128xf32, #tpu.memory_space<vmem>>, %arg10: memref<8x128xf32, #tpu.memory_space<vmem>>) attributes {dimension_semantics = [#tpu.dimension_semantics<parallel>], iteration_bounds = array<i64: 1>, scalar_prefetch = 0 : i64, scratch_operands = 0 : i64, tpu.core_type = #tpu.core_type<tc>, window_params = [{transform_indices = @transform_0, window_bounds = array<i64: 8, 32>}, {pipeline_mode = #tpu.pipeline_mode<synchronous>, transform_indices = @transform_1, window_bounds = array<i64: 32, 512>}, {pipeline_mode = #tpu.pipeline_mode<synchronous>, transform_indices = @transform_2, window_bounds = array<i64: 1, 512>}, {pipeline_mode = #tpu.pipeline_mode<synchronous>, transform_indices = @transform_3, window_bounds = array<i64: 512, 256>}, {pipeline_mode = #tpu.pipeline_mode<synchronous>, transform_indices = @transform_4, window_bounds = array<i64: 1, 256>}, {pipeline_mode = #tpu.pipeline_mode<synchronous>, transform_indices = @transform_5, window_bounds = array<i64: 256, 256>}, {pipeline_mode = #tpu.pipeline_mode<synchronous>, transform_indices = @transform_6, window_bounds = array<i64: 1, 256>}, {pipeline_mode = #tpu.pipeline_mode<synchronous>, transform_indices = @transform_7, window_bounds = array<i64: 256, 128>}, {pipeline_mode = #tpu.pipeline_mode<synchronous>, transform_indices = @transform_8, window_bounds = array<i64: 1, 128>}, {transform_indices = @transform_9, window_bounds = array<i64: 8, 128>}]} {
    %c0 = arith.constant 0 : index
    %c0_0 = arith.constant 0 : index
    %0 = vector.load %arg1[%c0, %c0_0] : memref<8x32xf32, #tpu.memory_space<vmem>>, vector<8x32xf32>
    %1 = arith.truncf %0 : vector<8x32xf32> to vector<8x32xbf16>
    %c0_1 = arith.constant 0 : index
    %c0_2 = arith.constant 0 : index
    %2 = vector.load %arg2[%c0_1, %c0_2] : memref<32x512xbf16, #tpu.memory_space<vmem>>, vector<32x512xbf16>
    %cst = arith.constant dense<0.000000e+00> : vector<8x512xf32>
    %3 = tpu.matmul %1, %2, %cst {dimension_numbers = #tpu.dot_dimension_numbers<[1], [0], [0], [1], [0, 0, 1, 1], [], []>} : vector<8x32xbf16>, vector<32x512xbf16>, vector<8x512xf32> -> vector<8x512xf32>
    %c0_3 = arith.constant 0 : index
    %c0_4 = arith.constant 0 : index
    %4 = vector.load %arg3[%c0_3, %c0_4] : memref<1x512xf32, #tpu.memory_space<vmem>>, vector<1x512xf32>
    %5 = vector.broadcast %4 : vector<1x512xf32> to vector<8x512xf32>
    %6 = arith.addf %3, %5 : vector<8x512xf32>
    %cst_5 = arith.constant 0.000000e+00 : f32
    %7 = vector.broadcast %cst_5 : f32 to vector<8x512xf32>
    %8 = arith.maximumf %6, %7 : vector<8x512xf32>
    %9 = arith.truncf %8 : vector<8x512xf32> to vector<8x512xbf16>
    %c0_6 = arith.constant 0 : index
    %c0_7 = arith.constant 0 : index
    %10 = vector.load %arg4[%c0_6, %c0_7] : memref<512x256xbf16, #tpu.memory_space<vmem>>, vector<512x256xbf16>
    %cst_8 = arith.constant dense<0.000000e+00> : vector<8x256xf32>
    %11 = tpu.matmul %9, %10, %cst_8 {dimension_numbers = #tpu.dot_dimension_numbers<[1], [0], [0], [1], [0, 0, 1, 1], [], []>} : vector<8x512xbf16>, vector<512x256xbf16>, vector<8x256xf32> -> vector<8x256xf32>
    %c0_9 = arith.constant 0 : index
    %c0_10 = arith.constant 0 : index
    %12 = vector.load %arg5[%c0_9, %c0_10] : memref<1x256xf32, #tpu.memory_space<vmem>>, vector<1x256xf32>
    %13 = vector.broadcast %12 : vector<1x256xf32> to vector<8x256xf32>
    %14 = arith.addf %11, %13 : vector<8x256xf32>
    %cst_11 = arith.constant 0.000000e+00 : f32
    %15 = vector.broadcast %cst_11 : f32 to vector<8x256xf32>
    %16 = arith.maximumf %14, %15 : vector<8x256xf32>
    %17 = arith.truncf %16 : vector<8x256xf32> to vector<8x256xbf16>
    %c0_12 = arith.constant 0 : index
    %c0_13 = arith.constant 0 : index
    %18 = vector.load %arg6[%c0_12, %c0_13] : memref<256x256xbf16, #tpu.memory_space<vmem>>, vector<256x256xbf16>
    %cst_14 = arith.constant dense<0.000000e+00> : vector<8x256xf32>
    %19 = tpu.matmul %17, %18, %cst_14 {dimension_numbers = #tpu.dot_dimension_numbers<[1], [0], [0], [1], [0, 0, 1, 1], [], []>} : vector<8x256xbf16>, vector<256x256xbf16>, vector<8x256xf32> -> vector<8x256xf32>
    %c0_15 = arith.constant 0 : index
    %c0_16 = arith.constant 0 : index
    %20 = vector.load %arg7[%c0_15, %c0_16] : memref<1x256xf32, #tpu.memory_space<vmem>>, vector<1x256xf32>
    %21 = vector.broadcast %20 : vector<1x256xf32> to vector<8x256xf32>
    %22 = arith.addf %19, %21 : vector<8x256xf32>
    %cst_17 = arith.constant 0.000000e+00 : f32
    %23 = vector.broadcast %cst_17 : f32 to vector<8x256xf32>
    %24 = arith.maximumf %22, %23 : vector<8x256xf32>
    %25 = arith.truncf %24 : vector<8x256xf32> to vector<8x256xbf16>
    %c0_18 = arith.constant 0 : index
    %c0_19 = arith.constant 0 : index
    %26 = vector.load %arg8[%c0_18, %c0_19] : memref<256x128xbf16, #tpu.memory_space<vmem>>, vector<256x128xbf16>
    %cst_20 = arith.constant dense<0.000000e+00> : vector<8x128xf32>
    %27 = tpu.matmul %25, %26, %cst_20 {dimension_numbers = #tpu.dot_dimension_numbers<[1], [0], [0], [1], [0, 0, 1, 1], [], []>} : vector<8x256xbf16>, vector<256x128xbf16>, vector<8x128xf32> -> vector<8x128xf32>
    %c0_21 = arith.constant 0 : index
    %c0_22 = arith.constant 0 : index
    %28 = vector.load %arg9[%c0_21, %c0_22] : memref<1x128xf32, #tpu.memory_space<vmem>>, vector<1x128xf32>
    %29 = vector.broadcast %28 : vector<1x128xf32> to vector<8x128xf32>
    %30 = arith.addf %27, %29 : vector<8x128xf32>
    %31 = tpu.iota {dimensions = array<i32: 1>} : vector<8x128xi32>
    %c8_i32 = arith.constant 8 : i32
    %32 = vector.broadcast %c8_i32 : i32 to vector<8x128xi32>
    %33 = arith.cmpi slt, %31, %32 : vector<8x128xi32>
    %cst_23 = arith.constant 0.000000e+00 : f32
    %34 = vector.broadcast %cst_23 : f32 to vector<8x128xf32>
    %35 = arith.select %33, %30, %34 : vector<8x128xi1>, vector<8x128xf32>
    %c127_i32 = arith.constant 127 : i32
    %36 = vector.broadcast %c127_i32 : i32 to vector<8x128xi32>
    %37 = arith.cmpi eq, %31, %36 : vector<8x128xi32>
    %cst_24 = arith.constant 0.000000e+00 : f32
    %38 = vector.broadcast %cst_24 : f32 to vector<8x128xf32>
    %39 = arith.select %37, %30, %38 : vector<8x128xi1>, vector<8x128xf32>
    %cst_25 = arith.constant dense<0.000000e+00> : vector<8xf32>
    %40 = vector.multi_reduction <add>, %39, %cst_25 [1] : vector<8x128xf32> to vector<8xf32>
    %41 = vector.shape_cast %40 : vector<8xf32> to vector<8x1xf32>
    %cst_26 = arith.constant dense<0.000000e+00> : vector<8xf32>
    %42 = vector.multi_reduction <add>, %35, %cst_26 [1] : vector<8x128xf32> to vector<8xf32>
    %43 = vector.shape_cast %42 : vector<8xf32> to vector<8x1xf32>
    %cst_27 = arith.constant 1.250000e-01 : f32
    %44 = vector.broadcast %cst_27 : f32 to vector<8x1xf32>
    %45 = arith.mulf %43, %44 : vector<8x1xf32>
    %46 = vector.broadcast %45 : vector<8x1xf32> to vector<8x128xf32>
    %47 = arith.subf %35, %46 : vector<8x128xf32>
    %48 = vector.broadcast %41 : vector<8x1xf32> to vector<8x128xf32>
    %49 = arith.addf %48, %47 : vector<8x128xf32>
    %cst_28 = arith.constant 0.000000e+00 : f32
    %50 = vector.broadcast %cst_28 : f32 to vector<8x128xf32>
    %51 = arith.select %33, %49, %50 : vector<8x128xi1>, vector<8x128xf32>
    %c0_29 = arith.constant 0 : index
    %c0_30 = arith.constant 0 : index
    %52 = vector.load %arg10[%c0_29, %c0_30] : memref<8x128xf32, #tpu.memory_space<vmem>>, vector<8x128xf32>
    tpu.vector_store %arg10[%c0_29, %c0_30], %51 {strides = array<i32>} : memref<8x128xf32, #tpu.memory_space<vmem>>, vector<8x128xf32>,
    return
  }
  func.func @transform_0(%arg0: i32) -> (i32, i32) {
    %c0_i32 = arith.constant 0 : i32
    %c0_i32_0 = arith.constant 0 : i32
    return %arg0, %c0_i32 : i32, i32
  }
  func.func @transform_1(%arg0: i32) -> (i32, i32) {
    %c0_i32 = arith.constant 0 : i32
    %c0_i32_0 = arith.constant 0 : i32
    %c0_i32_1 = arith.constant 0 : i32
    return %c0_i32, %c0_i32_0 : i32, i32
  }
  func.func @transform_2(%arg0: i32) -> (i32, i32) {
    %c0_i32 = arith.constant 0 : i32
    %c0_i32_0 = arith.constant 0 : i32
    %c0_i32_1 = arith.constant 0 : i32
    return %c0_i32, %c0_i32_0 : i32, i32
  }
  func.func @transform_3(%arg0: i32) -> (i32, i32) {
    %c0_i32 = arith.constant 0 : i32
    %c0_i32_0 = arith.constant 0 : i32
    %c0_i32_1 = arith.constant 0 : i32
    return %c0_i32, %c0_i32_0 : i32, i32
  }
  func.func @transform_4(%arg0: i32) -> (i32, i32) {
    %c0_i32 = arith.constant 0 : i32
    %c0_i32_0 = arith.constant 0 : i32
    %c0_i32_1 = arith.constant 0 : i32
    return %c0_i32, %c0_i32_0 : i32, i32
  }
  func.func @transform_5(%arg0: i32) -> (i32, i32) {
    %c0_i32 = arith.constant 0 : i32
    %c0_i32_0 = arith.constant 0 : i32
    %c0_i32_1 = arith.constant 0 : i32
    return %c0_i32, %c0_i32_0 : i32, i32
  }
  func.func @transform_6(%arg0: i32) -> (i32, i32) {
    %c0_i32 = arith.constant 0 : i32
    %c0_i32_0 = arith.constant 0 : i32
    %c0_i32_1 = arith.constant 0 : i32
    return %c0_i32, %c0_i32_0 : i32, i32
  }
  func.func @transform_7(%arg0: i32) -> (i32, i32) {
    %c0_i32 = arith.constant 0 : i32
    %c0_i32_0 = arith.constant 0 : i32
    %c0_i32_1 = arith.constant 0 : i32
    return %c0_i32, %c0_i32_0 : i32, i32
  }
  func.func @transform_8(%arg0: i32) -> (i32, i32) {
    %c0_i32 = arith.constant 0 : i32
    %c0_i32_0 = arith.constant 0 : i32
    %c0_i32_1 = arith.constant 0 : i32
    return %c0_i32, %c0_i32_0 : i32, i32
  }
  func.func @transform_9(%arg0: i32) -> (i32, i32) {
    %c0_i32 = arith.constant 0 : i32
    %c0_i32_0 = arith.constant 0 : i32
    return %arg0, %c0_i32 : i32, i32
  }
}

</mosaic_0001>

<llo_original>
// kernel: tpu_custom_call.1
$region0: #{tpu_custom_call.1}
  #allocation0 [shape = 'u32[]', space=smem, size = 0x4, offset = 0x4, fixed_abs, tag = 'smem constant byte address 0x4 - core index']
  #allocation1 [shape = 'u32[144,128]{1,0:T(1,128)}', space=vmem, size = 0x12000, scoped, tag = 'internal scratch']
  %s0 = inlined_call_operand.hbm [shape: f32[8,32], index: 0, kind: input, shape index: {}]
  %s1 = inlined_call_operand.hbm [shape: bf16[32,512], index: 1, kind: input, shape index: {}]
  %s2 = inlined_call_operand.vmem [shape: f32[1,512], index: 2, kind: input, shape index: {}]
  %s3 = inlined_call_operand.hbm [shape: bf16[512,256], index: 3, kind: input, shape index: {}]
  %s4 = inlined_call_operand.vmem [shape: f32[1,256], index: 4, kind: input, shape index: {}]
  %s5 = inlined_call_operand.hbm [shape: bf16[256,256], index: 5, kind: input, shape index: {}]
  %s6 = inlined_call_operand.vmem [shape: f32[1,256], index: 6, kind: input, shape index: {}]
  %s7 = inlined_call_operand.hbm [shape: bf16[256,128], index: 7, kind: input, shape index: {}]
  %s8 = inlined_call_operand.vmem [shape: f32[1,128], index: 8, kind: input, shape index: {}]
  %s9 = inlined_call_operand.hbm [shape: f32[8,128], index: 9, kind: output, shape index: {}]
  %s10 = sld [smem:[#allocation0]]
  $region66: #{tpu_custom_call.1} parent=0
    _
  %s12 = ssub.s32 1, %s10
  %s13 = scalar_select 0, %s12, %s10
  $region1: #{tpu_custom_call.1} parent=0
    #allocation2 [shape = 'u8[4096]{0}', space=vmem, size = 0x1000, scoped, tag = 'input window, operand 0, single buffered']
    #allocation3 [shape = 's32[1]{0}', space=sflag, size = 0x4, scoped, tag = 'scoped memory for tpu_custom_call.1']
    #allocation4 [shape = 's32[1]{0}', space=sflag, size = 0x4, scoped, tag = 'scoped memory for tpu_custom_call.1']
    #allocation5 [shape = 'u8[32768]{0}', space=vmem, size = 0x8000, scoped, tag = 'input window, operand 1, single buffered']
    #allocation6 [shape = 's32[1]{0}', space=sflag, size = 0x4, scoped, tag = 'scoped memory for tpu_custom_call.1']
    #allocation7 [shape = 'u8[262144]{0}', space=vmem, size = 0x40000, scoped, tag = 'input window, operand 3, single buffered']
    #allocation8 [shape = 'u8[131072]{0}', space=vmem, size = 0x20000, scoped, tag = 'input window, operand 5, single buffered']
    #allocation9 [shape = 's32[1]{0}', space=sflag, size = 0x4, scoped, tag = 'scoped memory for tpu_custom_call.1']
    #allocation10 [shape = 'u8[65536]{0}', space=vmem, size = 0x10000, scoped, tag = 'input window, operand 7, single buffered']
    #allocation11 [shape = 'u8[4096]{0}', space=vmem, size = 0x1000, scoped, tag = 'output window, operand 0, single buffered']
    %14 = vsyncpa [#allocation3], 0
    %15 = vsyncpa [#allocation6], 0
    %16 = vsyncpa [#allocation9], 0
    %17 = vsyncpa [#allocation4], 0
    // Predicated region
    $region2: #{tpu_custom_call.1} parent=1 // pred_check
      _
    $region3: #{tpu_custom_call.1} parent=1 // pred_check_branch
      %19 = sbr.rel (0) target = $region5
    $region4: #{tpu_custom_call.1} parent=1 // pred_region
      %s21 = ssub.s32 128, 128
      %22 = vsyncadd [#allocation3], %s21
      %s24 = sshll.u32 [#allocation2], 4
      %s25 = int_to_ptr.vmem [resolvable:$true] %s24
      %27 = dma.hbm_to_vmem [thread:$0]  %s0, 128, %s25, [#allocation3]
    $region5: #{tpu_custom_call.1} parent=1 // pred_fallthru
      _
    // Predicated region
    $region6: #{tpu_custom_call.1} parent=1 // pred_check
      _
    $region7: #{tpu_custom_call.1} parent=1 // pred_check_branch
      %29 = sbr.rel (0) target = $region9
    $region8: #{tpu_custom_call.1} parent=1 // pred_region
      %s31 = ssub.s32 1024, 1024
      %32 = vsyncadd [#allocation6], %s31
      %s33 = sshll.u32 [#allocation5], 4
      %s34 = int_to_ptr.vmem [resolvable:$true] %s33
      %39 = dma.hbm_to_vmem [thread:$0]  %s1, 1024, %s34, [#allocation6], 256, 256, 16
    $region9: #{tpu_custom_call.1} parent=1 // pred_fallthru
      _
    // Predicated region
    $region10: #{tpu_custom_call.1} parent=1 // pred_check
      _
    $region11: #{tpu_custom_call.1} parent=1 // pred_check_branch
      %41 = sbr.rel (0) target = $region13
    $region12: #{tpu_custom_call.1} parent=1 // pred_region
      _
    $region13: #{tpu_custom_call.1} parent=1 // pred_fallthru
      _
    // Predicated region
    $region14: #{tpu_custom_call.1} parent=1 // pred_check
      _
    $region15: #{tpu_custom_call.1} parent=1 // pred_check_branch
      %43 = sbr.rel (0) target = $region17
    $region16: #{tpu_custom_call.1} parent=1 // pred_region
      %s45 = ssub.s32 8192, 8192
      %46 = vsyncadd [#allocation6], %s45
      %s47 = sshll.u32 [#allocation7], 4
      %s48 = int_to_ptr.vmem [resolvable:$true] %s47
      %53 = dma.hbm_to_vmem [thread:$0]  %s3, 8192, %s48, [#allocation6], 128, 128, 8
    $region17: #{tpu_custom_call.1} parent=1 // pred_fallthru
      _
    // Predicated region
    $region18: #{tpu_custom_call.1} parent=1 // pred_check
      _
    $region19: #{tpu_custom_call.1} parent=1 // pred_check_branch
      %55 = sbr.rel (0) target = $region21
    $region20: #{tpu_custom_call.1} parent=1 // pred_region
      _
    $region21: #{tpu_custom_call.1} parent=1 // pred_fallthru
      _
    // Predicated region
    $region22: #{tpu_custom_call.1} parent=1 // pred_check
      _
    $region23: #{tpu_custom_call.1} parent=1 // pred_check_branch
      %57 = sbr.rel (0) target = $region25
    $region24: #{tpu_custom_call.1} parent=1 // pred_region
      %s59 = ssub.s32 4096, 4096
      %60 = vsyncadd [#allocation9], %s59
      %s61 = sshll.u32 [#allocation8], 4
      %s62 = int_to_ptr.vmem [resolvable:$true] %s61
      %67 = dma.hbm_to_vmem [thread:$0]  %s5, 4096, %s62, [#allocation9], 128, 128, 8
    $region25: #{tpu_custom_call.1} parent=1 // pred_fallthru
      _
    // Predicated region
    $region26: #{tpu_custom_call.1} parent=1 // pred_check
      _
    $region27: #{tpu_custom_call.1} parent=1 // pred_check_branch
      %69 = sbr.rel (0) target = $region29
    $region28: #{tpu_custom_call.1} parent=1 // pred_region
      _
    $region29: #{tpu_custom_call.1} parent=1 // pred_fallthru
      _
    // Predicated region
    $region30: #{tpu_custom_call.1} parent=1 // pred_check
      _
    $region31: #{tpu_custom_call.1} parent=1 // pred_check_branch
      %71 = sbr.rel (0) target = $region33
    $region32: #{tpu_custom_call.1} parent=1 // pred_region
      %s73 = ssub.s32 2048, 2048
      %74 = vsyncadd [#allocation9], %s73
      %s75 = sshll.u32 [#allocation10], 4
      %s76 = int_to_ptr.vmem [resolvable:$true] %s75
      %81 = dma.hbm_to_vmem [thread:$0]  %s7, 2048, %s76, [#allocation9], 64, 64, 4
    $region33: #{tpu_custom_call.1} parent=1 // pred_fallthru
      _
    // Predicated region
    $region34: #{tpu_custom_call.1} parent=1 // pred_check
      _
    $region35: #{tpu_custom_call.1} parent=1 // pred_check_branch
      %83 = sbr.rel (0) target = $region37
    $region36: #{tpu_custom_call.1} parent=1 // pred_region
      _
    $region37: #{tpu_custom_call.1} parent=1 // pred_fallthru
      _
    // Predicated region
    $region38: #{tpu_custom_call.1} parent=1 // pred_check
      _
    $region39: #{tpu_custom_call.1} parent=1 // pred_check_branch
      %85 = sbr.rel (0) target = $region41
    $region40: #{tpu_custom_call.1} parent=1 // pred_region
      %86 = dma.done [#allocation3], 128
    $region41: #{tpu_custom_call.1} parent=1 // pred_fallthru
      _
    // Predicated region
    $region42: #{tpu_custom_call.1} parent=1 // pred_check
      _
    $region43: #{tpu_custom_call.1} parent=1 // pred_check_branch
      %88 = sbr.rel (0) target = $region45
    $region44: #{tpu_custom_call.1} parent=1 // pred_region
      %89 = dma.done [#allocation6], 1024
    $region45: #{tpu_custom_call.1} parent=1 // pred_fallthru
      _
    // Predicated region
    $region46: #{tpu_custom_call.1} parent=1 // pred_check
      _
    $region47: #{tpu_custom_call.1} parent=1 // pred_check_branch
      %91 = sbr.rel (0) target = $region49
    $region48: #{tpu_custom_call.1} parent=1 // pred_region
      %92 = dma.done [#allocation6], 8192
    $region49: #{tpu_custom_call.1} parent=1 // pred_fallthru
      _
    // Predicated region
    $region50: #{tpu_custom_call.1} parent=1 // pred_check
      _
    $region51: #{tpu_custom_call.1} parent=1 // pred_check_branch
      %94 = sbr.rel (0) target = $region53
    $region52: #{tpu_custom_call.1} parent=1 // pred_region
      %95 = dma.done [#allocation9], 4096
    $region53: #{tpu_custom_call.1} parent=1 // pred_fallthru
      _
    // Predicated region
    $region54: #{tpu_custom_call.1} parent=1 // pred_check
      _
    $region55: #{tpu_custom_call.1} parent=1 // pred_check_branch
      %97 = sbr.rel (0) target = $region57
    $region56: #{tpu_custom_call.1} parent=1 // pred_region
      %98 = dma.done [#allocation9], 2048
    $region57: #{tpu_custom_call.1} parent=1 // pred_fallthru
      _
    %v100 = vld [vmem:[#allocation2] sm:$0xff]
    %v101 = vpack.c.bf16 %v100, %v100
    %v102 = vld [vmem:[#allocation5] sm:$0xff]
    %v103 = vld [vmem:[#allocation5 + $0x8] sm:$0xff]
    %v104 = vld [vmem:[#allocation5 + $0x10] sm:$0xff]
    %v105 = vld [vmem:[#allocation5 + $0x18] sm:$0xff]
    %v106 = vld [vmem:[#allocation5 + $0x20] sm:$0xff]
    %v107 = vld [vmem:[#allocation5 + $0x28] sm:$0xff]
    %v108 = vld [vmem:[#allocation5 + $0x30] sm:$0xff]
    %v109 = vld [vmem:[#allocation5 + $0x38] sm:$0xff]
    %v110 = vld [vmem:[%s2] sm:$0xf]
    %v112 = vlaneseq
    %v113 = vshrl.u32 %v112, 7
    %v114 = vsub.s32 0, %v113
    %v115 = vrot.slane %v110, %v114
    %v116 = vlaneseq
    %v117 = vshrl.u32 %v116, 7
    %v118 = vsub.s32 1, %v117
    %v119 = vrot.slane %v110, %v118
    %v120 = vlaneseq
    %v121 = vshrl.u32 %v120, 7
    %v122 = vsub.s32 2, %v121
    %v123 = vrot.slane %v110, %v122
    %v124 = vlaneseq
    %v125 = vshrl.u32 %v124, 7
    %v126 = vsub.s32 3, %v125
    %v127 = vrot.slane %v110, %v126
    %v140 = vunpack.c.l.b16 %v102
    %v141 = vunpack.c.h.b16 %v102
    %v142 = vunpack.c.l.b16 %v103
    %v143 = vunpack.c.h.b16 %v103
    %v144 = vunpack.c.l.b16 %v104
    %v145 = vunpack.c.h.b16 %v104
    %v146 = vunpack.c.l.b16 %v105
    %v147 = vunpack.c.h.b16 %v105
    %v148 = vunpack.c.l.b16 %v106
    %v149 = vunpack.c.h.b16 %v106
    %v150 = vunpack.c.l.b16 %v107
    %v151 = vunpack.c.h.b16 %v107
    %v152 = vunpack.c.l.b16 %v108
    %v153 = vunpack.c.h.b16 %v108
    %v154 = vunpack.c.l.b16 %v109
    %v155 = vunpack.c.h.b16 %v109
    %v156 = vpack.c.b16 %v144, %v140
    %v157 = vpack.c.b16 %v145, %v141
    %v158 = vpack.c.b16 %v146, %v142
    %v159 = vpack.c.b16 %v147, %v143
    %v160 = vpack.c.b16 %v152, %v148
    %v161 = vpack.c.b16 %v153, %v149
    %v162 = vpack.c.b16 %v154, %v150
    %v163 = vpack.c.b16 %v155, %v151
    %vm172 = vcmask 261120
    %v174 = vsel %vm172, %v101, 0
    %176 = vmatprep.subr.bf16.mxu0 %v157
    %177 = vmatpush1.bf16.msra.mxu0 %v156
    %178 = vmatprep.subr.bf16.mxu0 %v161
    %179 = vmatpush1.bf16.msra.mxu0 %v160
    %180 = vmatprep.subr.bf16.mxu0 0
    %181 = vmatpush1.bf16.msra.mxu0 0
    %182 = vmatprep.subr.bf16.mxu0 0
    %183 = vmatpush1.bf16.msra.mxu0 0
    %184 = vmatprep.subr.bf16.mxu0 0
    %185 = vmatpush1.bf16.msra.mxu0 0
    %186 = vmatprep.subr.bf16.mxu0 0
    %187 = vmatpush1.bf16.msra.mxu0 0
    %188 = vmatprep.subr.bf16.mxu0 0
    %189 = vmatpush1.bf16.msra.mxu0 0
    %190 = vmatprep.subr.bf16.mxu0 0
    %191 = vmatpush1.bf16.msra.mxu0 0
    %192 = vmatprep.subr.bf16.mxu0 0
    %193 = vmatpush1.bf16.msra.mxu0 0
    %194 = vmatprep.subr.bf16.mxu0 0
    %195 = vmatpush1.bf16.msra.mxu0 0
    %196 = vmatprep.subr.bf16.mxu0 0
    %197 = vmatpush1.bf16.msra.mxu0 0
    %198 = vmatprep.subr.bf16.mxu0 0
    %199 = vmatpush1.bf16.msra.mxu0 0
    %200 = vmatprep.subr.bf16.mxu0 0
    %201 = vmatpush1.bf16.msra.mxu0 0
    %202 = vmatprep.subr.bf16.mxu0 0
    %203 = vmatpush1.bf16.msra.mxu0 0
    %204 = vmatprep.subr.bf16.mxu0 0
    %205 = vmatpush1.bf16.msra.mxu0 0
    %206 = vmatprep.subr.bf16.mxu0 0
    %207 = vmatpush1.bf16.msra.mxu0 0
    %208 = vmatprep.mubr.bf16.mxu0 0
    %209 = vmatmul.mubr.bf16.gmra.mrb[0].mxu0 %v174
    %v210 = vpop.f32.mrb[0].mxu0
    %v211 = vadd.f32 %v115, %v210
    %v212 = vpop.f32.mrb[0].mxu0
    %v213 = vadd.f32 %v119, %v212
    %v214 = vpop.f32.mrb[0].mxu0
    %v215 = vpop.f32.mrb[0].mxu0
    %216 = vdwg.mxu0
    %217 = vmatprep.subr.bf16.mxu0 %v159
    %218 = vmatpush1.bf16.msra.mxu0 %v158
    %219 = vmatprep.subr.bf16.mxu0 %v163
    %220 = vmatpush1.bf16.msra.mxu0 %v162
    %221 = vmatprep.subr.bf16.mxu0 0
    %222 = vmatpush1.bf16.msra.mxu0 0
    %223 = vmatprep.subr.bf16.mxu0 0
    %224 = vmatpush1.bf16.msra.mxu0 0
    %225 = vmatprep.subr.bf16.mxu0 0
    %226 = vmatpush1.bf16.msra.mxu0 0
    %227 = vmatprep.subr.bf16.mxu0 0
    %228 = vmatpush1.bf16.msra.mxu0 0
    %229 = vmatprep.subr.bf16.mxu0 0
    %230 = vmatpush1.bf16.msra.mxu0 0
    %231 = vmatprep.subr.bf16.mxu0 0
    %232 = vmatpush1.bf16.msra.mxu0 0
    %233 = vmatprep.subr.bf16.mxu0 0
    %234 = vmatpush1.bf16.msra.mxu0 0
    %235 = vmatprep.subr.bf16.mxu0 0
    %236 = vmatpush1.bf16.msra.mxu0 0
    %237 = vmatprep.subr.bf16.mxu0 0
    %238 = vmatpush1.bf16.msra.mxu0 0
    %239 = vmatprep.subr.bf16.mxu0 0
    %240 = vmatpush1.bf16.msra.mxu0 0
    %241 = vmatprep.subr.bf16.mxu0 0
    %242 = vmatpush1.bf16.msra.mxu0 0
    %243 = vmatprep.subr.bf16.mxu0 0
    %244 = vmatpush1.bf16.msra.mxu0 0
    %245 = vmatprep.subr.bf16.mxu0 0
    %246 = vmatpush1.bf16.msra.mxu0 0
    %247 = vmatprep.subr.bf16.mxu0 0
    %248 = vmatpush1.bf16.msra.mxu0 0
    %249 = vmatprep.mubr.bf16.mxu0 0
    %250 = vmatmul.mubr.bf16.gmra.mrb[0].mxu0 %v174
    %v251 = vpop.f32.mrb[0].mxu0
    %v252 = vadd.f32 %v123, %v251
    %v253 = vpop.f32.mrb[0].mxu0
    %v254 = vadd.f32 %v127, %v253
    %v255 = vpop.f32.mrb[0].mxu0
    %v256 = vpop.f32.mrb[0].mxu0
    %257 = vdwg.mxu0
    %v258 = vmax.f32 %v211, 0.0
    %v259 = vmax.f32 %v213, 0.0
    %v260 = vmax.f32 %v252, 0.0
    %v261 = vmax.f32 %v254, 0.0
    %v262 = vpack.c.bf16 %v258, %v258
    %v263 = vpack.c.bf16 %v259, %v259
    %v264 = vpack.c.bf16 %v260, %v260
    %v265 = vpack.c.bf16 %v261, %v261
    %v266 = vld [vmem:[#allocation7] sm:$0xff]
    %v267 = vld [vmem:[#allocation7 + $0x8] sm:$0xff]
    %v268 = vld [vmem:[#allocation7 + $0x10] sm:$0xff]
    %v269 = vld [vmem:[#allocation7 + $0x18] sm:$0xff]
    %v270 = vld [vmem:[#allocation7 + $0x20] sm:$0xff]
    %v271 = vld [vmem:[#allocation7 + $0x28] sm:$0xff]
    %v272 = vld [vmem:[#allocation7 + $0x30] sm:$0xff]
    %v273 = vld [vmem:[#allocation7 + $0x38] sm:$0xff]
    %v274 = vld [vmem:[#allocation7 + $0x40] sm:$0xff]
    %v275 = vld [vmem:[#allocation7 + $0x48] sm:$0xff]
    %v276 = vld [vmem:[#allocation7 + $0x50] sm:$0xff]
    %v277 = vld [vmem:[#allocation7 + $0x58] sm:$0xff]
    %v278 = vld [vmem:[#allocation7 + $0x60] sm:$0xff]
    %v279 = vld [vmem:[#allocation7 + $0x68] sm:$0xff]
    %v280 = vld [vmem:[#allocation7 + $0x70] sm:$0xff]
    %v281 = vld [vmem:[#allocation7 + $0x78] sm:$0xff]
    %v282 = vld [vmem:[#allocation7 + $0x80] sm:$0xff]
    %v283 = vld [vmem:[#allocation7 + $0x88] sm:$0xff]
    %v284 = vld [vmem:[#allocation7 + $0x90] sm:$0xff]
    %v285 = vld [vmem:[#allocation7 + $0x98] sm:$0xff]
    %v286 = vld [vmem:[#allocation7 + $0xa0] sm:$0xff]
    %v287 = vld [vmem:[#allocation7 + $0xa8] sm:$0xff]
    %v288 = vld [vmem:[#allocation7 + $0xb0] sm:$0xff]
    %v289 = vld [vmem:[#allocation7 + $0xb8] sm:$0xff]
    %v290 = vld [vmem:[#allocation7 + $0xc0] sm:$0xff]
    %v291 = vld [vmem:[#allocation7 + $0xc8] sm:$0xff]
    %v292 = vld [vmem:[#allocation7 + $0xd0] sm:$0xff]
    %v293 = vld [vmem:[#allocation7 + $0xd8] sm:$0xff]
    %v294 = vld [vmem:[#allocation7 + $0xe0] sm:$0xff]
    %v295 = vld [vmem:[#allocation7 + $0xe8] sm:$0xff]
    %v296 = vld [vmem:[#allocation7 + $0xf0] sm:$0xff]
    %v297 = vld [vmem:[#allocation7 + $0xf8] sm:$0xff]
    %v298 = vld [vmem:[#allocation7 + $0x100] sm:$0xff]
    %v299 = vld [vmem:[#allocation7 + $0x108] sm:$0xff]
    %v300 = vld [vmem:[#allocation7 + $0x110] sm:$0xff]
    %v301 = vld [vmem:[#allocation7 + $0x118] sm:$0xff]
    %v302 = vld [vmem:[#allocation7 + $0x120] sm:$0xff]
    %v303 = vld [vmem:[#allocation7 + $0x128] sm:$0xff]
    %v304 = vld [vmem:[#allocation7 + $0x130] sm:$0xff]
    %v305 = vld [vmem:[#allocation7 + $0x138] sm:$0xff]
    %v306 = vld [vmem:[#allocation7 + $0x140] sm:$0xff]
    %v307 = vld [vmem:[#allocation7 + $0x148] sm:$0xff]
    %v308 = vld [vmem:[#allocation7 + $0x150] sm:$0xff]
    %v309 = vld [vmem:[#allocation7 + $0x158] sm:$0xff]
    %v310 = vld [vmem:[#allocation7 + $0x160] sm:$0xff]
    %v311 = vld [vmem:[#allocation7 + $0x168] sm:$0xff]
    %v312 = vld [vmem:[#allocation7 + $0x170] sm:$0xff]
    %v313 = vld [vmem:[#allocation7 + $0x178] sm:$0xff]
    %v314 = vld [vmem:[#allocation7 + $0x180] sm:$0xff]
    %v315 = vld [vmem:[#allocation7 + $0x188] sm:$0xff]
    %v316 = vld [vmem:[#allocation7 + $0x190] sm:$0xff]
    %v317 = vld [vmem:[#allocation7 + $0x198] sm:$0xff]
    %v318 = vld [vmem:[#allocation7 + $0x1a0] sm:$0xff]
    %v319 = vld [vmem:[#allocation7 + $0x1a8] sm:$0xff]
    %v320 = vld [vmem:[#allocation7 + $0x1b0] sm:$0xff]
    %v321 = vld [vmem:[#allocation7 + $0x1b8] sm:$0xff]
    %v322 = vld [vmem:[#allocation7 + $0x1c0] sm:$0xff]
    %v323 = vld [vmem:[#allocation7 + $0x1c8] sm:$0xff]
    %v324 = vld [vmem:[#allocation7 + $0x1d0] sm:$0xff]
    %v325 = vld [vmem:[#allocation7 + $0x1d8] sm:$0xff]
    %v326 = vld [vmem:[#allocation7 + $0x1e0] sm:$0xff]
    %v327 = vld [vmem:[#allocation7 + $0x1e8] sm:$0xff]
    %v328 = vld [vmem:[#allocation7 + $0x1f0] sm:$0xff]
    %v329 = vld [vmem:[#allocation7 + $0x1f8] sm:$0xff]
    %v330 = vld [vmem:[%s4] sm:$0x3]
    %v332 = vlaneseq
    %v333 = vshrl.u32 %v332, 7
    %v334 = vsub.s32 0, %v333
    %v335 = vrot.slane %v330, %v334
    %v336 = vlaneseq
    %v337 = vshrl.u32 %v336, 7
    %v338 = vsub.s32 1, %v337
    %v339 = vrot.slane %v330, %v338
    %v406 = vunpack.c.l.b16 %v266
    %v407 = vunpack.c.h.b16 %v266
    %v408 = vunpack.c.l.b16 %v267
    %v409 = vunpack.c.h.b16 %v267
    %v410 = vunpack.c.l.b16 %v268
    %v411 = vunpack.c.h.b16 %v268
    %v412 = vunpack.c.l.b16 %v269
    %v413 = vunpack.c.h.b16 %v269
    %v414 = vunpack.c.l.b16 %v270
    %v415 = vunpack.c.h.b16 %v270
    %v416 = vunpack.c.l.b16 %v271
    %v417 = vunpack.c.h.b16 %v271
    %v418 = vunpack.c.l.b16 %v272
    %v419 = vunpack.c.h.b16 %v272
    %v420 = vunpack.c.l.b16 %v273
    %v421 = vunpack.c.h.b16 %v273
    %v422 = vunpack.c.l.b16 %v274
    %v423 = vunpack.c.h.b16 %v274
    %v424 = vunpack.c.l.b16 %v275
    %v425 = vunpack.c.h.b16 %v275
    %v426 = vunpack.c.l.b16 %v276
    %v427 = vunpack.c.h.b16 %v276
    %v428 = vunpack.c.l.b16 %v277
    %v429 = vunpack.c.h.b16 %v277
    %v430 = vunpack.c.l.b16 %v278
    %v431 = vunpack.c.h.b16 %v278
    %v432 = vunpack.c.l.b16 %v279
    %v433 = vunpack.c.h.b16 %v279
    %v434 = vunpack.c.l.b16 %v280
    %v435 = vunpack.c.h.b16 %v280
    %v436 = vunpack.c.l.b16 %v281
    %v437 = vunpack.c.h.b16 %v281
    %v438 = vunpack.c.l.b16 %v282
    %v439 = vunpack.c.h.b16 %v282
    %v440 = vunpack.c.l.b16 %v283
    %v441 = vunpack.c.h.b16 %v283
    %v442 = vunpack.c.l.b16 %v284
    %v443 = vunpack.c.h.b16 %v284
    %v444 = vunpack.c.l.b16 %v285
    %v445 = vunpack.c.h.b16 %v285
    %v446 = vunpack.c.l.b16 %v286
    %v447 = vunpack.c.h.b16 %v286
    %v448 = vunpack.c.l.b16 %v287
    %v449 = vunpack.c.h.b16 %v287
    %v450 = vunpack.c.l.b16 %v288
    %v451 = vunpack.c.h.b16 %v288
    %v452 = vunpack.c.l.b16 %v289
    %v453 = vunpack.c.h.b16 %v289
    %v454 = vunpack.c.l.b16 %v290
    %v455 = vunpack.c.h.b16 %v290
    %v456 = vunpack.c.l.b16 %v291
    %v457 = vunpack.c.h.b16 %v291
    %v458 = vunpack.c.l.b16 %v292
    %v459 = vunpack.c.h.b16 %v292
    %v460 = vunpack.c.l.b16 %v293
    %v461 = vunpack.c.h.b16 %v293
    %v462 = vunpack.c.l.b16 %v294
    %v463 = vunpack.c.h.b16 %v294
    %v464 = vunpack.c.l.b16 %v295
    %v465 = vunpack.c.h.b16 %v295
    %v466 = vunpack.c.l.b16 %v296
    %v467 = vunpack.c.h.b16 %v296
    %v468 = vunpack.c.l.b16 %v297
    %v469 = vunpack.c.h.b16 %v297
    %v470 = vunpack.c.l.b16 %v298
    %v471 = vunpack.c.h.b16 %v298
    %v472 = vunpack.c.l.b16 %v299
    %v473 = vunpack.c.h.b16 %v299
    %v474 = vunpack.c.l.b16 %v300
    %v475 = vunpack.c.h.b16 %v300
    %v476 = vunpack.c.l.b16 %v301
    %v477 = vunpack.c.h.b16 %v301
    %v478 = vunpack.c.l.b16 %v302
    %v479 = vunpack.c.h.b16 %v302
    %v480 = vunpack.c.l.b16 %v303
    %v481 = vunpack.c.h.b16 %v303
    %v482 = vunpack.c.l.b16 %v304
    %v483 = vunpack.c.h.b16 %v304
    %v484 = vunpack.c.l.b16 %v305
    %v485 = vunpack.c.h.b16 %v305
    %v486 = vunpack.c.l.b16 %v306
    %v487 = vunpack.c.h.b16 %v306
    %v488 = vunpack.c.l.b16 %v307
    %v489 = vunpack.c.h.b16 %v307
    %v490 = vunpack.c.l.b16 %v308
    %v491 = vunpack.c.h.b16 %v308
    %v492 = vunpack.c.l.b16 %v309
    %v493 = vunpack.c.h.b16 %v309
    %v494 = vunpack.c.l.b16 %v310
    %v495 = vunpack.c.h.b16 %v310
    %v496 = vunpack.c.l.b16 %v311
    %v497 = vunpack.c.h.b16 %v311
    %v498 = vunpack.c.l.b16 %v312
    %v499 = vunpack.c.h.b16 %v312
    %v500 = vunpack.c.l.b16 %v313
    %v501 = vunpack.c.h.b16 %v313
    %v502 = vunpack.c.l.b16 %v314
    %v503 = vunpack.c.h.b16 %v314
    %v504 = vunpack.c.l.b16 %v315
    %v505 = vunpack.c.h.b16 %v315
    %v506 = vunpack.c.l.b16 %v316
    %v507 = vunpack.c.h.b16 %v316
    %v508 = vunpack.c.l.b16 %v317
    %v509 = vunpack.c.h.b16 %v317
    %v510 = vunpack.c.l.b16 %v318
    %v511 = vunpack.c.h.b16 %v318
    %v512 = vunpack.c.l.b16 %v319
    %v513 = vunpack.c.h.b16 %v319
    %v514 = vunpack.c.l.b16 %v320
    %v515 = vunpack.c.h.b16 %v320
    %v516 = vunpack.c.l.b16 %v321
    %v517 = vunpack.c.h.b16 %v321
    %v518 = vunpack.c.l.b16 %v322
    %v519 = vunpack.c.h.b16 %v322
    %v520 = vunpack.c.l.b16 %v323
    %v521 = vunpack.c.h.b16 %v323
    %v522 = vunpack.c.l.b16 %v324
    %v523 = vunpack.c.h.b16 %v324
    %v524 = vunpack.c.l.b16 %v325
    %v525 = vunpack.c.h.b16 %v325
    %v526 = vunpack.c.l.b16 %v326
    %v527 = vunpack.c.h.b16 %v326
    %v528 = vunpack.c.l.b16 %v327
    %v529 = vunpack.c.h.b16 %v327
    %v530 = vunpack.c.l.b16 %v328
    %v531 = vunpack.c.h.b16 %v328
    %v532 = vunpack.c.l.b16 %v329
    %v533 = vunpack.c.h.b16 %v329
    %v534 = vpack.c.b16 %v408, %v406
    %v535 = vpack.c.b16 %v409, %v407
    %v536 = vpack.c.b16 %v412, %v410
    %v537 = vpack.c.b16 %v413, %v411
    %v538 = vpack.c.b16 %v416, %v414
    %v539 = vpack.c.b16 %v417, %v415
    %v540 = vpack.c.b16 %v420, %v418
    %v541 = vpack.c.b16 %v421, %v419
    %v542 = vpack.c.b16 %v424, %v422
    %v543 = vpack.c.b16 %v425, %v423
    %v544 = vpack.c.b16 %v428, %v426
    %v545 = vpack.c.b16 %v429, %v427
    %v546 = vpack.c.b16 %v432, %v430
    %v547 = vpack.c.b16 %v433, %v431
    %v548 = vpack.c.b16 %v436, %v434
    %v549 = vpack.c.b16 %v437, %v435
    %v550 = vpack.c.b16 %v440, %v438
    %v551 = vpack.c.b16 %v441, %v439
    %v552 = vpack.c.b16 %v444, %v442
    %v553 = vpack.c.b16 %v445, %v443
    %v554 = vpack.c.b16 %v448, %v446
    %v555 = vpack.c.b16 %v449, %v447
    %v556 = vpack.c.b16 %v452, %v450
    %v557 = vpack.c.b16 %v453, %v451
    %v558 = vpack.c.b16 %v456, %v454
    %v559 = vpack.c.b16 %v457, %v455
    %v560 = vpack.c.b16 %v460, %v458
    %v561 = vpack.c.b16 %v461, %v459
    %v562 = vpack.c.b16 %v464, %v462
    %v563 = vpack.c.b16 %v465, %v463
    %v564 = vpack.c.b16 %v468, %v466
    %v565 = vpack.c.b16 %v469, %v467
    %v566 = vpack.c.b16 %v472, %v470
    %v567 = vpack.c.b16 %v473, %v471
    %v568 = vpack.c.b16 %v476, %v474
    %v569 = vpack.c.b16 %v477, %v475
    %v570 = vpack.c.b16 %v480, %v478
    %v571 = vpack.c.b16 %v481, %v479
    %v572 = vpack.c.b16 %v484, %v482
    %v573 = vpack.c.b16 %v485, %v483
    %v574 = vpack.c.b16 %v488, %v486
    %v575 = vpack.c.b16 %v489, %v487
    %v576 = vpack.c.b16 %v492, %v490
    %v577 = vpack.c.b16 %v493, %v491
    %v578 = vpack.c.b16 %v496, %v494
    %v579 = vpack.c.b16 %v497, %v495
    %v580 = vpack.c.b16 %v500, %v498
    %v581 = vpack.c.b16 %v501, %v499
    %v582 = vpack.c.b16 %v504, %v502
    %v583 = vpack.c.b16 %v505, %v503
    %v584 = vpack.c.b16 %v508, %v506
    %v585 = vpack.c.b16 %v509, %v507
    %v586 = vpack.c.b16 %v512, %v510
    %v587 = vpack.c.b16 %v513, %v511
    %v588 = vpack.c.b16 %v516, %v514
    %v589 = vpack.c.b16 %v517, %v515
    %v590 = vpack.c.b16 %v520, %v518
    %v591 = vpack.c.b16 %v521, %v519
    %v592 = vpack.c.b16 %v524, %v522
    %v593 = vpack.c.b16 %v525, %v523
    %v594 = vpack.c.b16 %v528, %v526
    %v595 = vpack.c.b16 %v529, %v527
    %v596 = vpack.c.b16 %v532, %v530
    %v597 = vpack.c.b16 %v533, %v531
    %662 = vmatprep.subr.bf16.mxu0 %v535
    %663 = vmatpush1.bf16.msra.mxu0 %v534
    %664 = vmatprep.subr.bf16.mxu0 %v537
    %665 = vmatpush1.bf16.msra.mxu0 %v536
    %666 = vmatprep.subr.bf16.mxu0 %v539
    %667 = vmatpush1.bf16.msra.mxu0 %v538
    %668 = vmatprep.subr.bf16.mxu0 %v541
    %669 = vmatpush1.bf16.msra.mxu0 %v540
    %670 = vmatprep.subr.bf16.mxu0 %v543
    %671 = vmatpush1.bf16.msra.mxu0 %v542
    %672 = vmatprep.subr.bf16.mxu0 %v545
    %673 = vmatpush1.bf16.msra.mxu0 %v544
    %674 = vmatprep.subr.bf16.mxu0 %v547
    %675 = vmatpush1.bf16.msra.mxu0 %v546
    %676 = vmatprep.subr.bf16.mxu0 %v549
    %677 = vmatpush1.bf16.msra.mxu0 %v548
    %678 = vmatprep.subr.bf16.mxu0 %v551
    %679 = vmatpush1.bf16.msra.mxu0 %v550
    %680 = vmatprep.subr.bf16.mxu0 %v553
    %681 = vmatpush1.bf16.msra.mxu0 %v552
    %682 = vmatprep.subr.bf16.mxu0 %v555
    %683 = vmatpush1.bf16.msra.mxu0 %v554
    %684 = vmatprep.subr.bf16.mxu0 %v557
    %685 = vmatpush1.bf16.msra.mxu0 %v556
    %686 = vmatprep.subr.bf16.mxu0 %v559
    %687 = vmatpush1.bf16.msra.mxu0 %v558
    %688 = vmatprep.subr.bf16.mxu0 %v561
    %689 = vmatpush1.bf16.msra.mxu0 %v560
    %690 = vmatprep.subr.bf16.mxu0 %v563
    %691 = vmatpush1.bf16.msra.mxu0 %v562
    %692 = vmatprep.subr.bf16.mxu0 %v565
    %693 = vmatpush1.bf16.msra.mxu0 %v564
    %694 = vmatprep.mubr.bf16.mxu0 %v263
    %695 = vmatmul.mubr.bf16.gmra.mrb[0].mxu0 %v262
    %v696 = vpop.f32.mrb[0].mxu0
    %v697 = vadd.f32 %v335, %v696
    %v698 = vpop.f32.mrb[0].mxu0
    %v699 = vadd.f32 %v339, %v698
    %v700 = vpop.f32.mrb[0].mxu0
    %v701 = vpop.f32.mrb[0].mxu0
    %702 = vdwg.mxu0
    %703 = vmatprep.subr.bf16.mxu0 %v567
    %704 = vmatpush1.bf16.msra.mxu0 %v566
    %705 = vmatprep.subr.bf16.mxu0 %v569
    %706 = vmatpush1.bf16.msra.mxu0 %v568
    %707 = vmatprep.subr.bf16.mxu0 %v571
    %708 = vmatpush1.bf16.msra.mxu0 %v570
    %709 = vmatprep.subr.bf16.mxu0 %v573
    %710 = vmatpush1.bf16.msra.mxu0 %v572
    %711 = vmatprep.subr.bf16.mxu0 %v575
    %712 = vmatpush1.bf16.msra.mxu0 %v574
    %713 = vmatprep.subr.bf16.mxu0 %v577
    %714 = vmatpush1.bf16.msra.mxu0 %v576
    %715 = vmatprep.subr.bf16.mxu0 %v579
    %716 = vmatpush1.bf16.msra.mxu0 %v578
    %717 = vmatprep.subr.bf16.mxu0 %v581
    %718 = vmatpush1.bf16.msra.mxu0 %v580
    %719 = vmatprep.subr.bf16.mxu0 %v583
    %720 = vmatpush1.bf16.msra.mxu0 %v582
    %721 = vmatprep.subr.bf16.mxu0 %v585
    %722 = vmatpush1.bf16.msra.mxu0 %v584
    %723 = vmatprep.subr.bf16.mxu0 %v587
    %724 = vmatpush1.bf16.msra.mxu0 %v586
    %725 = vmatprep.subr.bf16.mxu0 %v589
    %726 = vmatpush1.bf16.msra.mxu0 %v588
    %727 = vmatprep.subr.bf16.mxu0 %v591
    %728 = vmatpush1.bf16.msra.mxu0 %v590
    %729 = vmatprep.subr.bf16.mxu0 %v593
    %730 = vmatpush1.bf16.msra.mxu0 %v592
    %731 = vmatprep.subr.bf16.mxu0 %v595
    %732 = vmatpush1.bf16.msra.mxu0 %v594
    %733 = vmatprep.subr.bf16.mxu0 %v597
    %734 = vmatpush1.bf16.msra.mxu0 %v596
    %735 = vmatprep.mubr.bf16.mxu0 %v265
    %736 = vmatmul.mubr.bf16.gmra.mrb[0].mxu0 %v264
    %v737 = vpop.f32.mrb[0].mxu0
    %v738 = vadd.f32 %v697, %v737
    %v739 = vpop.f32.mrb[0].mxu0
    %v740 = vadd.f32 %v699, %v739
    %v741 = vpop.f32.mrb[0].mxu0
    %v742 = vpop.f32.mrb[0].mxu0
    %743 = vdwg.mxu0
    %v744 = vmax.f32 %v738, 0.0
    %v745 = vmax.f32 %v740, 0.0
    %v746 = vpack.c.bf16 %v744, %v744
    %v747 = vpack.c.bf16 %v745, %v745
    %v748 = vld [vmem:[#allocation8] sm:$0xff]
    %v749 = vld [vmem:[#allocation8 + $0x8] sm:$0xff]
    %v750 = vld [vmem:[#allocation8 + $0x10] sm:$0xff]
    %v751 = vld [vmem:[#allocation8 + $0x18] sm:$0xff]
    %v752 = vld [vmem:[#allocation8 + $0x20] sm:$0xff]
    %v753 = vld [vmem:[#allocation8 + $0x28] sm:$0xff]
    %v754 = vld [vmem:[#allocation8 + $0x30] sm:$0xff]
    %v755 = vld [vmem:[#allocation8 + $0x38] sm:$0xff]
    %v756 = vld [vmem:[#allocation8 + $0x40] sm:$0xff]
    %v757 = vld [vmem:[#allocation8 + $0x48] sm:$0xff]
    %v758 = vld [vmem:[#allocation8 + $0x50] sm:$0xff]
    %v759 = vld [vmem:[#allocation8 + $0x58] sm:$0xff]
    %v760 = vld [vmem:[#allocation8 + $0x60] sm:$0xff]
    %v761 = vld [vmem:[#allocation8 + $0x68] sm:$0xff]
    %v762 = vld [vmem:[#allocation8 + $0x70] sm:$0xff]
    %v763 = vld [vmem:[#allocation8 + $0x78] sm:$0xff]
    %v764 = vld [vmem:[#allocation8 + $0x80] sm:$0xff]
    %v765 = vld [vmem:[#allocation8 + $0x88] sm:$0xff]
    %v766 = vld [vmem:[#allocation8 + $0x90] sm:$0xff]
    %v767 = vld [vmem:[#allocation8 + $0x98] sm:$0xff]
    %v768 = vld [vmem:[#allocation8 + $0xa0] sm:$0xff]
    %v769 = vld [vmem:[#allocation8 + $0xa8] sm:$0xff]
    %v770 = vld [vmem:[#allocation8 + $0xb0] sm:$0xff]
    %v771 = vld [vmem:[#allocation8 + $0xb8] sm:$0xff]
    %v772 = vld [vmem:[#allocation8 + $0xc0] sm:$0xff]
    %v773 = vld [vmem:[#allocation8 + $0xc8] sm:$0xff]
    %v774 = vld [vmem:[#allocation8 + $0xd0] sm:$0xff]
    %v775 = vld [vmem:[#allocation8 + $0xd8] sm:$0xff]
    %v776 = vld [vmem:[#allocation8 + $0xe0] sm:$0xff]
    %v777 = vld [vmem:[#allocation8 + $0xe8] sm:$0xff]
    %v778 = vld [vmem:[#allocation8 + $0xf0] sm:$0xff]
    %v779 = vld [vmem:[#allocation8 + $0xf8] sm:$0xff]
    %v780 = vld [vmem:[%s6] sm:$0x3]
    %v782 = vlaneseq
    %v783 = vshrl.u32 %v782, 7
    %v784 = vsub.s32 0, %v783
    %v785 = vrot.slane %v780, %v784
    %v786 = vlaneseq
    %v787 = vshrl.u32 %v786, 7
    %v788 = vsub.s32 1, %v787
    %v789 = vrot.slane %v780, %v788
    %v824 = vunpack.c.l.b16 %v748
    %v825 = vunpack.c.h.b16 %v748
    %v826 = vunpack.c.l.b16 %v749
    %v827 = vunpack.c.h.b16 %v749
    %v828 = vunpack.c.l.b16 %v750
    %v829 = vunpack.c.h.b16 %v750
    %v830 = vunpack.c.l.b16 %v751
    %v831 = vunpack.c.h.b16 %v751
    %v832 = vunpack.c.l.b16 %v752
    %v833 = vunpack.c.h.b16 %v752
    %v834 = vunpack.c.l.b16 %v753
    %v835 = vunpack.c.h.b16 %v753
    %v836 = vunpack.c.l.b16 %v754
    %v837 = vunpack.c.h.b16 %v754
    %v838 = vunpack.c.l.b16 %v755
    %v839 = vunpack.c.h.b16 %v755
    %v840 = vunpack.c.l.b16 %v756
    %v841 = vunpack.c.h.b16 %v756
    %v842 = vunpack.c.l.b16 %v757
    %v843 = vunpack.c.h.b16 %v757
    %v844 = vunpack.c.l.b16 %v758
    %v845 = vunpack.c.h.b16 %v758
    %v846 = vunpack.c.l.b16 %v759
    %v847 = vunpack.c.h.b16 %v759
    %v848 = vunpack.c.l.b16 %v760
    %v849 = vunpack.c.h.b16 %v760
    %v850 = vunpack.c.l.b16 %v761
    %v851 = vunpack.c.h.b16 %v761
    %v852 = vunpack.c.l.b16 %v762
    %v853 = vunpack.c.h.b16 %v762
    %v854 = vunpack.c.l.b16 %v763
    %v855 = vunpack.c.h.b16 %v763
    %v856 = vunpack.c.l.b16 %v764
    %v857 = vunpack.c.h.b16 %v764
    %v858 = vunpack.c.l.b16 %v765
    %v859 = vunpack.c.h.b16 %v765
    %v860 = vunpack.c.l.b16 %v766
    %v861 = vunpack.c.h.b16 %v766
    %v862 = vunpack.c.l.b16 %v767
    %v863 = vunpack.c.h.b16 %v767
    %v864 = vunpack.c.l.b16 %v768
    %v865 = vunpack.c.h.b16 %v768
    %v866 = vunpack.c.l.b16 %v769
    %v867 = vunpack.c.h.b16 %v769
    %v868 = vunpack.c.l.b16 %v770
    %v869 = vunpack.c.h.b16 %v770
    %v870 = vunpack.c.l.b16 %v771
    %v871 = vunpack.c.h.b16 %v771
    %v872 = vunpack.c.l.b16 %v772
    %v873 = vunpack.c.h.b16 %v772
    %v874 = vunpack.c.l.b16 %v773
    %v875 = vunpack.c.h.b16 %v773
    %v876 = vunpack.c.l.b16 %v774
    %v877 = vunpack.c.h.b16 %v774
    %v878 = vunpack.c.l.b16 %v775
    %v879 = vunpack.c.h.b16 %v775
    %v880 = vunpack.c.l.b16 %v776
    %v881 = vunpack.c.h.b16 %v776
    %v882 = vunpack.c.l.b16 %v777
    %v883 = vunpack.c.h.b16 %v777
    %v884 = vunpack.c.l.b16 %v778
    %v885 = vunpack.c.h.b16 %v778
    %v886 = vunpack.c.l.b16 %v779
    %v887 = vunpack.c.h.b16 %v779
    %v888 = vpack.c.b16 %v826, %v824
    %v889 = vpack.c.b16 %v827, %v825
    %v890 = vpack.c.b16 %v830, %v828
    %v891 = vpack.c.b16 %v831, %v829
    %v892 = vpack.c.b16 %v834, %v832
    %v893 = vpack.c.b16 %v835, %v833
    %v894 = vpack.c.b16 %v838, %v836
    %v895 = vpack.c.b16 %v839, %v837
    %v896 = vpack.c.b16 %v842, %v840
    %v897 = vpack.c.b16 %v843, %v841
    %v898 = vpack.c.b16 %v846, %v844
    %v899 = vpack.c.b16 %v847, %v845
    %v900 = vpack.c.b16 %v850, %v848
    %v901 = vpack.c.b16 %v851, %v849
    %v902 = vpack.c.b16 %v854, %v852
    %v903 = vpack.c.b16 %v855, %v853
    %v904 = vpack.c.b16 %v858, %v856
    %v905 = vpack.c.b16 %v859, %v857
    %v906 = vpack.c.b16 %v862, %v860
    %v907 = vpack.c.b16 %v863, %v861
    %v908 = vpack.c.b16 %v866, %v864
    %v909 = vpack.c.b16 %v867, %v865
    %v910 = vpack.c.b16 %v870, %v868
    %v911 = vpack.c.b16 %v871, %v869
    %v912 = vpack.c.b16 %v874, %v872
    %v913 = vpack.c.b16 %v875, %v873
    %v914 = vpack.c.b16 %v878, %v876
    %v915 = vpack.c.b16 %v879, %v877
    %v916 = vpack.c.b16 %v882, %v880
    %v917 = vpack.c.b16 %v883, %v881
    %v918 = vpack.c.b16 %v886, %v884
    %v919 = vpack.c.b16 %v887, %v885
    %952 = vmatprep.subr.bf16.mxu0 %v889
    %953 = vmatpush1.bf16.msra.mxu0 %v888
    %954 = vmatprep.subr.bf16.mxu0 %v891
    %955 = vmatpush1.bf16.msra.mxu0 %v890
    %956 = vmatprep.subr.bf16.mxu0 %v893
    %957 = vmatpush1.bf16.msra.mxu0 %v892
    %958 = vmatprep.subr.bf16.mxu0 %v895
    %959 = vmatpush1.bf16.msra.mxu0 %v894
    %960 = vmatprep.subr.bf16.mxu0 %v897
    %961 = vmatpush1.bf16.msra.mxu0 %v896
    %962 = vmatprep.subr.bf16.mxu0 %v899
    %963 = vmatpush1.bf16.msra.mxu0 %v898
    %964 = vmatprep.subr.bf16.mxu0 %v901
    %965 = vmatpush1.bf16.msra.mxu0 %v900
    %966 = vmatprep.subr.bf16.mxu0 %v903
    %967 = vmatpush1.bf16.msra.mxu0 %v902
    %968 = vmatprep.subr.bf16.mxu0 %v905
    %969 = vmatpush1.bf16.msra.mxu0 %v904
    %970 = vmatprep.subr.bf16.mxu0 %v907
    %971 = vmatpush1.bf16.msra.mxu0 %v906
    %972 = vmatprep.subr.bf16.mxu0 %v909
    %973 = vmatpush1.bf16.msra.mxu0 %v908
    %974 = vmatprep.subr.bf16.mxu0 %v911
    %975 = vmatpush1.bf16.msra.mxu0 %v910
    %976 = vmatprep.subr.bf16.mxu0 %v913
    %977 = vmatpush1.bf16.msra.mxu0 %v912
    %978 = vmatprep.subr.bf16.mxu0 %v915
    %979 = vmatpush1.bf16.msra.mxu0 %v914
    %980 = vmatprep.subr.bf16.mxu0 %v917
    %981 = vmatpush1.bf16.msra.mxu0 %v916
    %982 = vmatprep.subr.bf16.mxu0 %v919
    %983 = vmatpush1.bf16.msra.mxu0 %v918
    %984 = vmatprep.mubr.bf16.mxu0 %v747
    %985 = vmatmul.mubr.bf16.gmra.mrb[0].mxu0 %v746
    %v986 = vpop.f32.mrb[0].mxu0
    %v987 = vadd.f32 %v785, %v986
    %v988 = vpop.f32.mrb[0].mxu0
    %v989 = vadd.f32 %v789, %v988
    %v990 = vpop.f32.mrb[0].mxu0
    %v991 = vpop.f32.mrb[0].mxu0
    %992 = vdwg.mxu0
    %v993 = vmax.f32 %v987, 0.0
    %v994 = vmax.f32 %v989, 0.0
    %v995 = vpack.c.bf16 %v993, %v993
    %v996 = vpack.c.bf16 %v994, %v994
    %v997 = vld [vmem:[#allocation10] sm:$0xf]
    %v998 = vld [vmem:[#allocation10 + $0x4] sm:$0xf]
    %v999 = vld [vmem:[#allocation10 + $0x8] sm:$0xf]
    %v1000 = vld [vmem:[#allocation10 + $0xc] sm:$0xf]
    %v1001 = vld [vmem:[#allocation10 + $0x10] sm:$0xf]
    %v1002 = vld [vmem:[#allocation10 + $0x14] sm:$0xf]
    %v1003 = vld [vmem:[#allocation10 + $0x18] sm:$0xf]
    %v1004 = vld [vmem:[#allocation10 + $0x1c] sm:$0xf]
    %v1005 = vld [vmem:[#allocation10 + $0x20] sm:$0xf]
    %v1006 = vld [vmem:[#allocation10 + $0x24] sm:$0xf]
    %v1007 = vld [vmem:[#allocation10 + $0x28] sm:$0xf]
    %v1008 = vld [vmem:[#allocation10 + $0x2c] sm:$0xf]
    %v1009 = vld [vmem:[#allocation10 + $0x30] sm:$0xf]
    %v1010 = vld [vmem:[#allocation10 + $0x34] sm:$0xf]
    %v1011 = vld [vmem:[#allocation10 + $0x38] sm:$0xf]
    %v1012 = vld [vmem:[#allocation10 + $0x3c] sm:$0xf]
    %v1013 = vld [vmem:[#allocation10 + $0x40] sm:$0xf]
    %v1014 = vld [vmem:[#allocation10 + $0x44] sm:$0xf]
    %v1015 = vld [vmem:[#allocation10 + $0x48] sm:$0xf]
    %v1016 = vld [vmem:[#allocation10 + $0x4c] sm:$0xf]
    %v1017 = vld [vmem:[#allocation10 + $0x50] sm:$0xf]
    %v1018 = vld [vmem:[#allocation10 + $0x54] sm:$0xf]
    %v1019 = vld [vmem:[#allocation10 + $0x58] sm:$0xf]
    %v1020 = vld [vmem:[#allocation10 + $0x5c] sm:$0xf]
    %v1021 = vld [vmem:[#allocation10 + $0x60] sm:$0xf]
    %v1022 = vld [vmem:[#allocation10 + $0x64] sm:$0xf]
    %v1023 = vld [vmem:[#allocation10 + $0x68] sm:$0xf]
    %v1024 = vld [vmem:[#allocation10 + $0x6c] sm:$0xf]
    %v1025 = vld [vmem:[#allocation10 + $0x70] sm:$0xf]
    %v1026 = vld [vmem:[#allocation10 + $0x74] sm:$0xf]
    %v1027 = vld [vmem:[#allocation10 + $0x78] sm:$0xf]
    %v1028 = vld [vmem:[#allocation10 + $0x7c] sm:$0xf]
    %v1029 = vld [vmem:[%s8] sm:$0x1]
    %v1031 = vlaneseq
    %v1032 = vshrl.u32 %v1031, 7
    %v1033 = vsub.s32 0, %v1032
    %v1034 = vrot.slane %v1029, %v1033
    %v1068 = vunpack.c.l.b16 %v997
    %v1069 = vunpack.c.l.b16 %v998
    %v1070 = vunpack.c.l.b16 %v999
    %v1071 = vunpack.c.l.b16 %v1000
    %v1072 = vunpack.c.l.b16 %v1001
    %v1073 = vunpack.c.l.b16 %v1002
    %v1074 = vunpack.c.l.b16 %v1003
    %v1075 = vunpack.c.l.b16 %v1004
    %v1076 = vunpack.c.l.b16 %v1005
    %v1077 = vunpack.c.l.b16 %v1006
    %v1078 = vunpack.c.l.b16 %v1007
    %v1079 = vunpack.c.l.b16 %v1008
    %v1080 = vunpack.c.l.b16 %v1009
    %v1081 = vunpack.c.l.b16 %v1010
    %v1082 = vunpack.c.l.b16 %v1011
    %v1083 = vunpack.c.l.b16 %v1012
    %v1084 = vunpack.c.l.b16 %v1013
    %v1085 = vunpack.c.l.b16 %v1014
    %v1086 = vunpack.c.l.b16 %v1015
    %v1087 = vunpack.c.l.b16 %v1016
    %v1088 = vunpack.c.l.b16 %v1017
    %v1089 = vunpack.c.l.b16 %v1018
    %v1090 = vunpack.c.l.b16 %v1019
    %v1091 = vunpack.c.l.b16 %v1020
    %v1092 = vunpack.c.l.b16 %v1021
    %v1093 = vunpack.c.l.b16 %v1022
    %v1094 = vunpack.c.l.b16 %v1023
    %v1095 = vunpack.c.l.b16 %v1024
    %v1096 = vunpack.c.l.b16 %v1025
    %v1097 = vunpack.c.l.b16 %v1026
    %v1098 = vunpack.c.l.b16 %v1027
    %v1099 = vunpack.c.l.b16 %v1028
    %v1100 = vpack.c.b16 %v1069, %v1068
    %v1101 = vpack.c.b16 %v1071, %v1070
    %v1102 = vpack.c.b16 %v1073, %v1072
    %v1103 = vpack.c.b16 %v1075, %v1074
    %v1104 = vpack.c.b16 %v1077, %v1076
    %v1105 = vpack.c.b16 %v1079, %v1078
    %v1106 = vpack.c.b16 %v1081, %v1080
    %v1107 = vpack.c.b16 %v1083, %v1082
    %v1108 = vpack.c.b16 %v1085, %v1084
    %v1109 = vpack.c.b16 %v1087, %v1086
    %v1110 = vpack.c.b16 %v1089, %v1088
    %v1111 = vpack.c.b16 %v1091, %v1090
    %v1112 = vpack.c.b16 %v1093, %v1092
    %v1113 = vpack.c.b16 %v1095, %v1094
    %v1114 = vpack.c.b16 %v1097, %v1096
    %v1115 = vpack.c.b16 %v1099, %v1098
    %1132 = vmatprep.subr.bf16.mxu0 0
    %1133 = vmatpush1.bf16.msra.mxu0 %v1100
    %1134 = vmatprep.subr.bf16.mxu0 0
    %1135 = vmatpush1.bf16.msra.mxu0 %v1101
    %1136 = vmatprep.subr.bf16.mxu0 0
    %1137 = vmatpush1.bf16.msra.mxu0 %v1102
    %1138 = vmatprep.subr.bf16.mxu0 0
    %1139 = vmatpush1.bf16.msra.mxu0 %v1103
    %1140 = vmatprep.subr.bf16.mxu0 0
    %1141 = vmatpush1.bf16.msra.mxu0 %v1104
    %1142 = vmatprep.subr.bf16.mxu0 0
    %1143 = vmatpush1.bf16.msra.mxu0 %v1105
    %1144 = vmatprep.subr.bf16.mxu0 0
    %1145 = vmatpush1.bf16.msra.mxu0 %v1106
    %1146 = vmatprep.subr.bf16.mxu0 0
    %1147 = vmatpush1.bf16.msra.mxu0 %v1107
    %1148 = vmatprep.subr.bf16.mxu0 0
    %1149 = vmatpush1.bf16.msra.mxu0 %v1108
    %1150 = vmatprep.subr.bf16.mxu0 0
    %1151 = vmatpush1.bf16.msra.mxu0 %v1109
    %1152 = vmatprep.subr.bf16.mxu0 0
    %1153 = vmatpush1.bf16.msra.mxu0 %v1110
    %1154 = vmatprep.subr.bf16.mxu0 0
    %1155 = vmatpush1.bf16.msra.mxu0 %v1111
    %1156 = vmatprep.subr.bf16.mxu0 0
    %1157 = vmatpush1.bf16.msra.mxu0 %v1112
    %1158 = vmatprep.subr.bf16.mxu0 0
    %1159 = vmatpush1.bf16.msra.mxu0 %v1113
    %1160 = vmatprep.subr.bf16.mxu0 0
    %1161 = vmatpush1.bf16.msra.mxu0 %v1114
    %1162 = vmatprep.subr.bf16.mxu0 0
    %1163 = vmatpush1.bf16.msra.mxu0 %v1115
    %1164 = vmatprep.mubr.bf16.mxu0 %v996
    %1165 = vmatmul.mubr.bf16.gmra.mrb[0].mxu0 %v995
    %v1166 = vpop.f32.mrb[0].mxu0
    %v1167 = vadd.f32 %v1034, %v1166
    %v1168 = vpop.f32.mrb[0].mxu0
    %v1169 = vpop.f32.mrb[0].mxu0
    %v1170 = vpop.f32.mrb[0].mxu0
    %1171 = vdwg.mxu0
    %v1172 = vlaneseq
    %v1173 = vand.u32 %v1172, 127
    %vm1174 = vcmp.lt.s32.totalorder %v1173, 8
    %v1175 = vsel %vm1174, %v1167, 0.0
    %vm1176 = vcmp.eq.s32.totalorder %v1173, 127
    %v1177 = vsel %vm1176, %v1167, 0.0
    %1178 = vadd.xlane.f32.xlu0 %v1177
    %v1179 = vpop.xlane.xlu0 %1178
    %1180 = vadd.xlane.f32.xlu0 %v1175
    %v1181 = vpop.xlane.xlu0 %1180
    %v1182 = vmul.f32 %v1181, 0.125
    %v1183 = vsub.f32 %v1175, %v1182
    %v1184 = vadd.f32 %v1179, %v1183
    %v1185 = vsel %vm1174, %v1184, 0.0
    %1186 = vst [vmem:[#allocation11] sm:$0xff] %v1185
    // Predicated region
    $region58: #{tpu_custom_call.1} parent=1 // pred_check
      _
    $region59: #{tpu_custom_call.1} parent=1 // pred_check_branch
      %1188 = sbr.rel (0) target = $region61
    $region60: #{tpu_custom_call.1} parent=1 // pred_region
      %s1190 = ssub.s32 128, 128
      %1191 = vsyncadd [#allocation4], %s1190
      %s1193 = sshll.u32 [#allocation11], 4
      %s1194 = int_to_ptr.vmem [resolvable:$true] %s1193
      %1196 = dma.vmem_to_hbm [thread:$0]  %s1194, 128, %s9, [#allocation4]
    $region61: #{tpu_custom_call.1} parent=1 // pred_fallthru
      _
    // Predicated region
    $region62: #{tpu_custom_call.1} parent=1 // pred_check
      _
    $region63: #{tpu_custom_call.1} parent=1 // pred_check_branch
      %1198 = sbr.rel (0) target = $region65
    $region64: #{tpu_custom_call.1} parent=1 // pred_region
      %1199 = dma.done [#allocation4], 128
    $region65: #{tpu_custom_call.1} parent=1 // pred_fallthru
      _
    %1200 = vsyncpa [#allocation3], 1
    %1201 = vsyncpa [#allocation6], 1
    %1202 = vsyncpa [#allocation9], 1
    %1203 = vsyncpa [#allocation4], 1

</llo_original>
